<compile_context>
chip_gen: v7x
topology: tpu7x:2x2x1
jax: 0.10.0
libtpu: 0.0.40
codegen_flags: <defaults>
</compile_context>

<pallas_src>
import math

import jax
import jax.numpy as jnp
from jax import lax
from jax.experimental import pallas as pl
from jax.experimental.pallas import tpu as pltpu


def _round_up(x, m):
    return (x + m - 1) // m * m


# ---------------------------------------------------------------------------
# Phase 1: input projection GEMM   gates_x = X @ Wx^T + bias     ("parallel")
# ---------------------------------------------------------------------------
def _gates_x_kernel(x_ref, wx_ref, b_ref, out_ref):
    # x_ref : (tm, Ep)   wx_ref : (Ep, 4Hp)   b_ref : (1, 4Hp)   out : (tm, 4Hp)
    out_ref[...] = (
        jnp.dot(x_ref[...], wx_ref[...], preferred_element_type=jnp.float32)
        + b_ref[...]
    ).astype(out_ref.dtype)


# ---------------------------------------------------------------------------
# Phase 2: sequential recurrence over time, Tc steps per grid iteration
# ---------------------------------------------------------------------------
def _lstm_recurrent_kernel(gx_ref, wh_ref, out_ref, h_scr, c_scr):
    """gx_ref : (Tc, Bp, 4Hp) precomputed x-projection (+ bias), f32
       wh_ref : (Hp, 4Hp)     hidden weights (transposed), compute dtype
       out_ref: (Tc, Bp, Hp)
       h_scr, c_scr : (Bp, Hp) f32, persist across grid iterations."""
    @pl.when(pl.program_id(0) == 0)
    def _():
        h_scr[...] = jnp.zeros_like(h_scr)
        c_scr[...] = jnp.zeros_like(c_scr)

    hp = h_scr.shape[1]
    tc = gx_ref.shape[0]
    wh = wh_ref[...]                       # resident weight, hoisted out of loop

    def step(t, carry):
        gx = gx_ref[t]                     # (Bp, 4Hp) f32 (bias already folded in)
        h_prev = h_scr[...]
        gates = gx + jnp.dot(
            h_prev.astype(wh.dtype), wh, preferred_element_type=jnp.float32
        )
        # gate order along 4Hp matches the PyTorch chunk order: [i | f | o | g]
        i = jax.nn.sigmoid(gates[:, 0 * hp:1 * hp])
        f = jax.nn.sigmoid(gates[:, 1 * hp:2 * hp])
        o = jax.nn.sigmoid(gates[:, 2 * hp:3 * hp])
        g = jnp.tanh(gates[:, 3 * hp:4 * hp])
        c_new = g * i + c_scr[...] * f
        h_new = jnp.tanh(c_new) * o
        c_scr[...] = c_new
        h_scr[...] = h_new
        out_ref[t] = h_new.astype(out_ref.dtype)
        return carry

    lax.fori_loop(0, tc, step, 0, unroll=True)


# ---------------------------------------------------------------------------
# Wrapper
# ---------------------------------------------------------------------------
def lstm_forward(embeds, w_x, w_h, b_i, b_f, b_o, b_g,
                 *, compute_dtype=jnp.float32, time_chunk=16):
    """embeds: (T, B, E) f32; w_x: (4H, E); w_h: (4H, H); biases: (H,).
    Returns (T, B, H) f32, matching the PyTorch module's forward."""
    T, B, E = embeds.shape
    H = w_h.shape[1]

    Bp = _round_up(B, 8)        # sublane multiple
    Hp = _round_up(H, 128)      # lane multiple (keeps gate slices 128-aligned)
    Ep = _round_up(E, 128)

    # --- per-gate padding so the [i|f|o|g] layout keeps a stride of Hp ------
    def pad_gate_weight(w, d_in, d_in_p):
        blocks = [w[k * H:(k + 1) * H] for k in range(4)]
        blocks = [jnp.pad(b, ((0, Hp - H), (0, d_in_p - d_in))) for b in blocks]
        return jnp.concatenate(blocks, axis=0)            # (4Hp, d_in_p)

    wx_p = pad_gate_weight(w_x, E, Ep)                    # (4Hp, Ep)
    wh_p = pad_gate_weight(w_h, H, Hp)                    # (4Hp, Hp)
    bias = jnp.concatenate(
        [jnp.pad(b, (0, Hp - H)) for b in (b_i, b_f, b_o, b_g)]
    ).reshape(1, 4 * Hp).astype(jnp.float32)

    wx_t = jnp.transpose(wx_p).astype(compute_dtype)      # (Ep, 4Hp)
    wh_t = jnp.transpose(wh_p).astype(compute_dtype)      # (Hp, 4Hp)

    emb_p = jnp.pad(embeds, ((0, 0), (0, Bp - B), (0, Ep - E)))
    x2d = emb_p.reshape(T * Bp, Ep).astype(compute_dtype)

    # --- Phase 1: one big parallel GEMM for all time steps ------------------
    M = T * Bp
    tm = min(_round_up(M, 8), 256)
    Mp = _round_up(M, tm)
    if Mp > M:
        x2d = jnp.pad(x2d, ((0, Mp - M), (0, 0)))

    gates_x2d = pl.pallas_call(
        _gates_x_kernel,
        out_shape=jax.ShapeDtypeStruct((Mp, 4 * Hp), jnp.float32),
        grid_spec=pltpu.PrefetchScalarGridSpec(
            num_scalar_prefetch=0,
            grid=(Mp // tm,),
            in_specs=[
                pl.BlockSpec((tm, Ep), lambda m: (m, 0)),
                pl.BlockSpec((Ep, 4 * Hp), lambda m: (0, 0)),
                pl.BlockSpec((1, 4 * Hp), lambda m: (0, 0)),
            ],
            out_specs=pl.BlockSpec((tm, 4 * Hp), lambda m: (m, 0)),
        ),
        compiler_params=pltpu.CompilerParams(
            dimension_semantics=("parallel",),            # megacore-shardable
            vmem_limit_bytes=64 * 1024 * 1024,
        ),
    )(x2d, wx_t, bias)

    gates_x = gates_x2d[:M].reshape(T, Bp, 4 * Hp)

    # --- Phase 2: sequential recurrence, Tc steps per grid iteration --------
    Tc = min(T, time_chunk)
    Tp = _round_up(T, Tc)
    if Tp > T:
        # extra (discarded) tail steps; their outputs are sliced off below
        gates_x = jnp.pad(gates_x, ((0, Tp - T), (0, 0), (0, 0)))

    out = pl.pallas_call(
        _lstm_recurrent_kernel,
        out_shape=jax.ShapeDtypeStruct((Tp, Bp, Hp), jnp.float32),
        grid_spec=pltpu.PrefetchScalarGridSpec(
            num_scalar_prefetch=0,
            grid=(Tp // Tc,),
            in_specs=[
                pl.BlockSpec((Tc, Bp, 4 * Hp), lambda i: (i, 0, 0)),
                # Constant-index resident weight.  For very large H on v7x
                # (64 MiB VMEM), single-buffer this (pl.Buffered(1)) or tile 4H.
                pl.BlockSpec((Hp, 4 * Hp), lambda i: (0, 0)),
            ],
            out_specs=pl.BlockSpec((Tc, Bp, Hp), lambda i: (i, 0, 0)),
            scratch_shapes=[
                pltpu.VMEM((Bp, Hp), jnp.float32),   # h state
                pltpu.VMEM((Bp, Hp), jnp.float32),   # c state
            ],
        ),
        compiler_params=pltpu.CompilerParams(
            dimension_semantics=("arbitrary",),      # time recurrence is serial
            vmem_limit_bytes=64 * 1024 * 1024,
        ),
    )(gates_x, wh_t)

    return out[:T, :B, :H]


# ---------------------------------------------------------------------------
# Pure-JAX reference mirroring the PyTorch forward (for verification)
# ---------------------------------------------------------------------------
def lstm_reference(embeds, w_x, w_h, b_i, b_f, b_o, b_g):
    T, B, E = embeds.shape
    H = w_h.shape[1]
    bias = jnp.concatenate([b_i, b_f, b_o, b_g])

    def step(carry, x_t):
        h, c = carry
        gates = x_t @ w_x.T + h @ w_h.T + bias
        i = jax.nn.sigmoid(gates[:, 0 * H:1 * H])
        f = jax.nn.sigmoid(gates[:, 1 * H:2 * H])
        o = jax.nn.sigmoid(gates[:, 2 * H:3 * H])
        g = jnp.tanh(gates[:, 3 * H:4 * H])
        c = g * i + c * f
        h = jnp.tanh(c) * o
        return (h, c), h

    h0 = jnp.zeros((B, H), jnp.float32)
    c0 = jnp.zeros((B, H), jnp.float32)
    _, ys = lax.scan(step, (h0, c0), embeds)
    return ys


if __name__ == "__main__":
    # Small shapes consistent with the module's forward: (T, B, E), hidden H.
    T, B, E, H = 8, 4, 16, 32

    key = jax.random.PRNGKey(0)
    k_emb, k_wx, k_wh, k_bi, k_bf, k_bo, k_bg = jax.random.split(key, 7)

    bound = 1.0 / math.sqrt(H)  # nn.init.uniform_(-1/sqrt(H), 1/sqrt(H))
    w_x = jax.random.uniform(k_wx, (4 * H, E), jnp.float32, -bound, bound)
    w_h = jax.random.uniform(k_wh, (4 * H, H), jnp.float32, -bound, bound)
    b_i = jax.random.uniform(k_bi, (H,), jnp.float32, -bound, bound)
    b_f = jax.random.uniform(k_bf, (H,), jnp.float32, -bound, bound) + 1.0  # b_f += 1
    b_o = jax.random.uniform(k_bo, (H,), jnp.float32, -bound, bound)
    b_g = jax.random.uniform(k_bg, (H,), jnp.float32, -bound, bound)

    embeds = jax.random.normal(k_emb, (T, B, E), jnp.float32)

    ref = jax.block_until_ready(
        lstm_reference(embeds, w_x, w_h, b_i, b_f, b_o, b_g)
    )

    # f32 path (tight check)
    out = jax.block_until_ready(
        lstm_forward(embeds, w_x, w_h, b_i, b_f, b_o, b_g)
    )
    assert out.shape == (T, B, H)
    assert jnp.allclose(out, ref, atol=1e-4, rtol=1e-4)

    # bf16 MXU-operand path (f32 accumulate / f32 state) — looser tolerance.
    out_bf16 = jax.block_until_ready(
        lstm_forward(embeds, w_x, w_h, b_i, b_f, b_o, b_g,
                     compute_dtype=jnp.bfloat16)
    )
    assert out_bf16.shape == (T, B, H)
    assert float(jnp.max(jnp.abs(out_bf16 - ref))) < 0.1

    print("KERNEL_OK")
</pallas_src>

<mosaic_0001>
module attributes {stable_mosaic.version = 11 : i64} {
  func.func @_gates_x_kernel(%arg0: i32, %arg1: memref<64x128xf32, #tpu.memory_space<vmem>>, %arg2: memref<128x512xf32, #tpu.memory_space<vmem>>, %arg3: memref<1x512xf32, #tpu.memory_space<vmem>>, %arg4: memref<64x512xf32, #tpu.memory_space<vmem>>) attributes {dimension_semantics = [#tpu.dimension_semantics<parallel>], iteration_bounds = array<i64: 1>, scalar_prefetch = 0 : i64, scratch_operands = 0 : i64, tpu.core_type = #tpu.core_type<tc>, window_params = [{transform_indices = @transform_0, window_bounds = array<i64: 64, 128>}, {pipeline_mode = #tpu.pipeline_mode<synchronous>, transform_indices = @transform_1, window_bounds = array<i64: 128, 512>}, {pipeline_mode = #tpu.pipeline_mode<synchronous>, transform_indices = @transform_2, window_bounds = array<i64: 1, 512>}, {transform_indices = @transform_3, window_bounds = array<i64: 64, 512>}]} {
    %c0 = arith.constant 0 : index
    %c0_0 = arith.constant 0 : index
    %0 = vector.load %arg1[%c0, %c0_0] : memref<64x128xf32, #tpu.memory_space<vmem>>, vector<64x128xf32>
    %c0_1 = arith.constant 0 : index
    %c0_2 = arith.constant 0 : index
    %1 = vector.load %arg2[%c0_1, %c0_2] : memref<128x512xf32, #tpu.memory_space<vmem>>, vector<128x512xf32>
    %cst = arith.constant dense<0.000000e+00> : vector<64x512xf32>
    %2 = tpu.matmul %0, %1, %cst {dimension_numbers = #tpu.dot_dimension_numbers<[1], [0], [0], [1], [0, 0, 1, 1], [], []>} : vector<64x128xf32>, vector<128x512xf32>, vector<64x512xf32> -> vector<64x512xf32>
    %c0_3 = arith.constant 0 : index
    %c0_4 = arith.constant 0 : index
    %3 = vector.load %arg3[%c0_3, %c0_4] : memref<1x512xf32, #tpu.memory_space<vmem>>, vector<1x512xf32>
    %4 = vector.broadcast %3 : vector<1x512xf32> to vector<64x512xf32>
    %5 = arith.addf %2, %4 : vector<64x512xf32>
    %c0_5 = arith.constant 0 : index
    %c0_6 = arith.constant 0 : index
    %6 = vector.load %arg4[%c0_5, %c0_6] : memref<64x512xf32, #tpu.memory_space<vmem>>, vector<64x512xf32>
    tpu.vector_store %arg4[%c0_5, %c0_6], %5 {strides = array<i32>} : memref<64x512xf32, #tpu.memory_space<vmem>>, vector<64x512xf32>,
    return
  }
  func.func @transform_0(%arg0: i32) -> (i32, i32) {
    %c0_i32 = arith.constant 0 : i32
    %c0_i32_0 = arith.constant 0 : i32
    return %arg0, %c0_i32 : i32, i32
  }
  func.func @transform_1(%arg0: i32) -> (i32, i32) {
    %c0_i32 = arith.constant 0 : i32
    %c0_i32_0 = arith.constant 0 : i32
    %c0_i32_1 = arith.constant 0 : i32
    return %c0_i32, %c0_i32_0 : i32, i32
  }
  func.func @transform_2(%arg0: i32) -> (i32, i32) {
    %c0_i32 = arith.constant 0 : i32
    %c0_i32_0 = arith.constant 0 : i32
    %c0_i32_1 = arith.constant 0 : i32
    return %c0_i32, %c0_i32_0 : i32, i32
  }
  func.func @transform_3(%arg0: i32) -> (i32, i32) {
    %c0_i32 = arith.constant 0 : i32
    %c0_i32_0 = arith.constant 0 : i32
    return %arg0, %c0_i32 : i32, i32
  }
}

</mosaic_0001>

<llo_original>
// kernel: tpu_custom_call.1
$region0: #{tpu_custom_call.1}
  #allocation0 [shape = 'u32[]', space=smem, size = 0x4, offset = 0x4, fixed_abs, tag = 'smem constant byte address 0x4 - core index']
  #allocation1 [shape = 'u32[144,128]{1,0:T(1,128)}', space=vmem, size = 0x12000, scoped, tag = 'internal scratch']
  %s0 = inlined_call_operand.hbm [shape: f32[64,128], index: 0, kind: input, shape index: {}]
  %s1 = inlined_call_operand.hbm [shape: f32[128,512], index: 1, kind: input, shape index: {}]
  %s2 = inlined_call_operand.hbm [shape: f32[1,512], index: 2, kind: input, shape index: {}]
  %s3 = inlined_call_operand.hbm [shape: f32[64,512], index: 3, kind: output, shape index: {}]
  %s4 = sld [smem:[#allocation0]]
  $region34: #{tpu_custom_call.1} parent=0
    _
  %s6 = ssub.s32 1, %s4
  %s7 = scalar_select 0, %s6, %s4
  $region1: #{tpu_custom_call.1} parent=0
    #allocation2 [shape = 'u8[32768]{0}', space=vmem, size = 0x8000, scoped, tag = 'input window, operand 0, single buffered']
    #allocation3 [shape = 's32[1]{0}', space=sflag, size = 0x4, scoped, tag = 'scoped memory for tpu_custom_call.1']
    #allocation4 [shape = 's32[1]{0}', space=sflag, size = 0x4, scoped, tag = 'scoped memory for tpu_custom_call.1']
    #allocation5 [shape = 'u8[262144]{0}', space=vmem, size = 0x40000, scoped, tag = 'input window, operand 1, single buffered']
    #allocation6 [shape = 's32[1]{0}', space=sflag, size = 0x4, scoped, tag = 'scoped memory for tpu_custom_call.1']
    #allocation7 [shape = 'u8[2048]{0}', space=vmem, size = 0x800, scoped, tag = 'input window, operand 2, single buffered']
    #allocation8 [shape = 'u8[131072]{0}', space=vmem, size = 0x20000, scoped, tag = 'output window, operand 0, single buffered']
    %8 = vsyncpa [#allocation3], 0
    %9 = vsyncpa [#allocation6], 0
    %10 = vsyncpa [#allocation4], 0
    // Predicated region
    $region2: #{tpu_custom_call.1} parent=1 // pred_check
      _
    $region3: #{tpu_custom_call.1} parent=1 // pred_check_branch
      %12 = sbr.rel (0) target = $region5
    $region4: #{tpu_custom_call.1} parent=1 // pred_region
      %s14 = ssub.s32 1024, 1024
      %15 = vsyncadd [#allocation3], %s14
      %s16 = sshll.u32 [#allocation2], 4
      %s17 = int_to_ptr.vmem [resolvable:$true] %s16
      %22 = dma.hbm_to_vmem [thread:$0]  %s0, 1024, %s17, [#allocation3], 128, 128, 8
    $region5: #{tpu_custom_call.1} parent=1 // pred_fallthru
      _
    // Predicated region
    $region6: #{tpu_custom_call.1} parent=1 // pred_check
      _
    $region7: #{tpu_custom_call.1} parent=1 // pred_check_branch
      %24 = sbr.rel (0) target = $region9
    $region8: #{tpu_custom_call.1} parent=1 // pred_region
      %s26 = ssub.s32 8192, 8192
      %27 = vsyncadd [#allocation6], %s26
      %s28 = sshll.u32 [#allocation5], 4
      %s29 = int_to_ptr.vmem [resolvable:$true] %s28
      %34 = dma.hbm_to_vmem [thread:$0]  %s1, 8192, %s29, [#allocation6], 512, 512, 32
    $region9: #{tpu_custom_call.1} parent=1 // pred_fallthru
      _
    // Predicated region
    $region10: #{tpu_custom_call.1} parent=1 // pred_check
      _
    $region11: #{tpu_custom_call.1} parent=1 // pred_check_branch
      %36 = sbr.rel (0) target = $region13
    $region12: #{tpu_custom_call.1} parent=1 // pred_region
      %s38 = ssub.s32 64, 64
      %39 = vsyncadd [#allocation6], %s38
      %s41 = sshll.u32 [#allocation7], 4
      %s42 = int_to_ptr.vmem [resolvable:$true] %s41
      %44 = dma.hbm_to_vmem [thread:$0]  %s2, 64, %s42, [#allocation6]
    $region13: #{tpu_custom_call.1} parent=1 // pred_fallthru
      _
    // Predicated region
    $region14: #{tpu_custom_call.1} parent=1 // pred_check
      _
    $region15: #{tpu_custom_call.1} parent=1 // pred_check_branch
      %46 = sbr.rel (0) target = $region17
    $region16: #{tpu_custom_call.1} parent=1 // pred_region
      %47 = dma.done [#allocation3], 1024
    $region17: #{tpu_custom_call.1} parent=1 // pred_fallthru
      _
    // Predicated region
    $region18: #{tpu_custom_call.1} parent=1 // pred_check
      _
    $region19: #{tpu_custom_call.1} parent=1 // pred_check_branch
      %49 = sbr.rel (0) target = $region21
    $region20: #{tpu_custom_call.1} parent=1 // pred_region
      %50 = dma.done [#allocation6], 8192
    $region21: #{tpu_custom_call.1} parent=1 // pred_fallthru
      _
    // Predicated region
    $region22: #{tpu_custom_call.1} parent=1 // pred_check
      _
    $region23: #{tpu_custom_call.1} parent=1 // pred_check_branch
      %52 = sbr.rel (0) target = $region25
    $region24: #{tpu_custom_call.1} parent=1 // pred_region
      %53 = dma.done [#allocation6], 64
    $region25: #{tpu_custom_call.1} parent=1 // pred_fallthru
      _
    %v54 = vld [vmem:[#allocation2] sm:$0xff]
    %v55 = vld [vmem:[#allocation2 + $0x8] sm:$0xff]
    %v56 = vld [vmem:[#allocation2 + $0x10] sm:$0xff]
    %v57 = vld [vmem:[#allocation2 + $0x18] sm:$0xff]
    %v58 = vld [vmem:[#allocation2 + $0x20] sm:$0xff]
    %v59 = vld [vmem:[#allocation2 + $0x28] sm:$0xff]
    %v60 = vld [vmem:[#allocation2 + $0x30] sm:$0xff]
    %v61 = vld [vmem:[#allocation2 + $0x38] sm:$0xff]
    %v62 = vld [vmem:[#allocation5] sm:$0xff]
    %v63 = vld [vmem:[#allocation5 + $0x8] sm:$0xff]
    %v64 = vld [vmem:[#allocation5 + $0x10] sm:$0xff]
    %v65 = vld [vmem:[#allocation5 + $0x18] sm:$0xff]
    %v66 = vld [vmem:[#allocation5 + $0x20] sm:$0xff]
    %v67 = vld [vmem:[#allocation5 + $0x28] sm:$0xff]
    %v68 = vld [vmem:[#allocation5 + $0x30] sm:$0xff]
    %v69 = vld [vmem:[#allocation5 + $0x38] sm:$0xff]
    %v70 = vld [vmem:[#allocation5 + $0x40] sm:$0xff]
    %v71 = vld [vmem:[#allocation5 + $0x48] sm:$0xff]
    %v72 = vld [vmem:[#allocation5 + $0x50] sm:$0xff]
    %v73 = vld [vmem:[#allocation5 + $0x58] sm:$0xff]
    %v74 = vld [vmem:[#allocation5 + $0x60] sm:$0xff]
    %v75 = vld [vmem:[#allocation5 + $0x68] sm:$0xff]
    %v76 = vld [vmem:[#allocation5 + $0x70] sm:$0xff]
    %v77 = vld [vmem:[#allocation5 + $0x78] sm:$0xff]
    %v78 = vld [vmem:[#allocation5 + $0x80] sm:$0xff]
    %v79 = vld [vmem:[#allocation5 + $0x88] sm:$0xff]
    %v80 = vld [vmem:[#allocation5 + $0x90] sm:$0xff]
    %v81 = vld [vmem:[#allocation5 + $0x98] sm:$0xff]
    %v82 = vld [vmem:[#allocation5 + $0xa0] sm:$0xff]
    %v83 = vld [vmem:[#allocation5 + $0xa8] sm:$0xff]
    %v84 = vld [vmem:[#allocation5 + $0xb0] sm:$0xff]
    %v85 = vld [vmem:[#allocation5 + $0xb8] sm:$0xff]
    %v86 = vld [vmem:[#allocation5 + $0xc0] sm:$0xff]
    %v87 = vld [vmem:[#allocation5 + $0xc8] sm:$0xff]
    %v88 = vld [vmem:[#allocation5 + $0xd0] sm:$0xff]
    %v89 = vld [vmem:[#allocation5 + $0xd8] sm:$0xff]
    %v90 = vld [vmem:[#allocation5 + $0xe0] sm:$0xff]
    %v91 = vld [vmem:[#allocation5 + $0xe8] sm:$0xff]
    %v92 = vld [vmem:[#allocation5 + $0xf0] sm:$0xff]
    %v93 = vld [vmem:[#allocation5 + $0xf8] sm:$0xff]
    %v94 = vld [vmem:[#allocation5 + $0x100] sm:$0xff]
    %v95 = vld [vmem:[#allocation5 + $0x108] sm:$0xff]
    %v96 = vld [vmem:[#allocation5 + $0x110] sm:$0xff]
    %v97 = vld [vmem:[#allocation5 + $0x118] sm:$0xff]
    %v98 = vld [vmem:[#allocation5 + $0x120] sm:$0xff]
    %v99 = vld [vmem:[#allocation5 + $0x128] sm:$0xff]
    %v100 = vld [vmem:[#allocation5 + $0x130] sm:$0xff]
    %v101 = vld [vmem:[#allocation5 + $0x138] sm:$0xff]
    %v102 = vld [vmem:[#allocation5 + $0x140] sm:$0xff]
    %v103 = vld [vmem:[#allocation5 + $0x148] sm:$0xff]
    %v104 = vld [vmem:[#allocation5 + $0x150] sm:$0xff]
    %v105 = vld [vmem:[#allocation5 + $0x158] sm:$0xff]
    %v106 = vld [vmem:[#allocation5 + $0x160] sm:$0xff]
    %v107 = vld [vmem:[#allocation5 + $0x168] sm:$0xff]
    %v108 = vld [vmem:[#allocation5 + $0x170] sm:$0xff]
    %v109 = vld [vmem:[#allocation5 + $0x178] sm:$0xff]
    %v110 = vld [vmem:[#allocation5 + $0x180] sm:$0xff]
    %v111 = vld [vmem:[#allocation5 + $0x188] sm:$0xff]
    %v112 = vld [vmem:[#allocation5 + $0x190] sm:$0xff]
    %v113 = vld [vmem:[#allocation5 + $0x198] sm:$0xff]
    %v114 = vld [vmem:[#allocation5 + $0x1a0] sm:$0xff]
    %v115 = vld [vmem:[#allocation5 + $0x1a8] sm:$0xff]
    %v116 = vld [vmem:[#allocation5 + $0x1b0] sm:$0xff]
    %v117 = vld [vmem:[#allocation5 + $0x1b8] sm:$0xff]
    %v118 = vld [vmem:[#allocation5 + $0x1c0] sm:$0xff]
    %v119 = vld [vmem:[#allocation5 + $0x1c8] sm:$0xff]
    %v120 = vld [vmem:[#allocation5 + $0x1d0] sm:$0xff]
    %v121 = vld [vmem:[#allocation5 + $0x1d8] sm:$0xff]
    %v122 = vld [vmem:[#allocation5 + $0x1e0] sm:$0xff]
    %v123 = vld [vmem:[#allocation5 + $0x1e8] sm:$0xff]
    %v124 = vld [vmem:[#allocation5 + $0x1f0] sm:$0xff]
    %v125 = vld [vmem:[#allocation5 + $0x1f8] sm:$0xff]
    %v126 = vld [vmem:[#allocation7] sm:$0xf]
    %v128 = vlaneseq
    %v129 = vshrl.u32 %v128, 7
    %v130 = vsub.s32 0, %v129
    %v131 = vrot.slane %v126, %v130
    %v132 = vlaneseq
    %v133 = vshrl.u32 %v132, 7
    %v134 = vsub.s32 1, %v133
    %v135 = vrot.slane %v126, %v134
    %v136 = vlaneseq
    %v137 = vshrl.u32 %v136, 7
    %v138 = vsub.s32 2, %v137
    %v139 = vrot.slane %v126, %v138
    %v140 = vlaneseq
    %v141 = vshrl.u32 %v140, 7
    %v142 = vsub.s32 3, %v141
    %v143 = vrot.slane %v126, %v142
    %148 = vmatprep.subr.mxu0 %v63
    %149 = vmatpush1.msra.mxu0 %v62
    %150 = vmatprep.subr.mxu0 %v67
    %151 = vmatpush1.msra.mxu0 %v66
    %152 = vmatprep.subr.mxu0 %v71
    %153 = vmatpush1.msra.mxu0 %v70
    %154 = vmatprep.subr.mxu0 %v75
    %155 = vmatpush1.msra.mxu0 %v74
    %156 = vmatprep.subr.mxu0 %v79
    %157 = vmatpush1.msra.mxu0 %v78
    %158 = vmatprep.subr.mxu0 %v83
    %159 = vmatpush1.msra.mxu0 %v82
    %160 = vmatprep.subr.mxu0 %v87
    %161 = vmatpush1.msra.mxu0 %v86
    %162 = vmatprep.subr.mxu0 %v91
    %163 = vmatpush1.msra.mxu0 %v90
    %164 = vmatprep.subr.mxu0 %v95
    %165 = vmatpush1.msra.mxu0 %v94
    %166 = vmatprep.subr.mxu0 %v99
    %167 = vmatpush1.msra.mxu0 %v98
    %168 = vmatprep.subr.mxu0 %v103
    %169 = vmatpush1.msra.mxu0 %v102
    %170 = vmatprep.subr.mxu0 %v107
    %171 = vmatpush1.msra.mxu0 %v106
    %172 = vmatprep.subr.mxu0 %v111
    %173 = vmatpush1.msra.mxu0 %v110
    %174 = vmatprep.subr.mxu0 %v115
    %175 = vmatpush1.msra.mxu0 %v114
    %176 = vmatprep.subr.mxu0 %v119
    %177 = vmatpush1.msra.mxu0 %v118
    %178 = vmatprep.subr.mxu0 %v123
    %179 = vmatpush1.msra.mxu0 %v122
    %180 = vmatprep.subr.mxu0 0.0
    %181 = vmatpush1.msra.mxu0 0.0
    %182 = vmatprep.subr.mxu0 0.0
    %183 = vmatpush1.msra.mxu0 0.0
    %184 = vmatprep.subr.mxu0 0.0
    %185 = vmatpush1.msra.mxu0 0.0
    %186 = vmatprep.subr.mxu0 0.0
    %187 = vmatpush1.msra.mxu0 0.0
    %188 = vmatprep.subr.mxu0 0.0
    %189 = vmatpush1.msra.mxu0 0.0
    %190 = vmatprep.subr.mxu0 0.0
    %191 = vmatpush1.msra.mxu0 0.0
    %192 = vmatprep.subr.mxu0 0.0
    %193 = vmatpush1.msra.mxu0 0.0
    %194 = vmatprep.subr.mxu0 0.0
    %195 = vmatpush1.msra.mxu0 0.0
    %196 = vmatprep.subr.mxu0 0.0
    %197 = vmatpush1.msra.mxu0 0.0
    %198 = vmatprep.subr.mxu0 0.0
    %199 = vmatpush1.msra.mxu0 0.0
    %200 = vmatprep.subr.mxu0 0.0
    %201 = vmatpush1.msra.mxu0 0.0
    %202 = vmatprep.subr.mxu0 0.0
    %203 = vmatpush1.msra.mxu0 0.0
    %204 = vmatprep.subr.mxu0 0.0
    %205 = vmatpush1.msra.mxu0 0.0
    %206 = vmatprep.subr.mxu0 0.0
    %207 = vmatpush1.msra.mxu0 0.0
    %208 = vmatprep.subr.mxu0 0.0
    %209 = vmatpush1.msra.mxu0 0.0
    %210 = vmatprep.subr.mxu0 0.0
    %211 = vmatpush1.msra.mxu0 0.0
    %212 = vmatprep.mubr.f32.mxu0 0.0
    %213 = vmatmul.mubr.f32.gmra.mrb[0].mxu0 %v54
    %v214 = vpop.f32.mrb[0].mxu0
    %v215 = vadd.f32 %v131, %v214
    %v216 = vpop.f32.mrb[0].mxu0
    %v217 = vadd.f32 %v135, %v216
    %218 = vmatprep.mubr.f32.mxu0 0.0
    %219 = vmatmul.mubr.f32.gmra.mrb[0].mxu0 %v55
    %v220 = vpop.f32.mrb[0].mxu0
    %v221 = vadd.f32 %v131, %v220
    %v222 = vpop.f32.mrb[0].mxu0
    %v223 = vadd.f32 %v135, %v222
    %224 = vmatprep.mubr.f32.mxu0 0.0
    %225 = vmatmul.mubr.f32.gmra.mrb[0].mxu0 %v56
    %v226 = vpop.f32.mrb[0].mxu0
    %v227 = vadd.f32 %v131, %v226
    %v228 = vpop.f32.mrb[0].mxu0
    %v229 = vadd.f32 %v135, %v228
    %230 = vmatprep.mubr.f32.mxu0 0.0
    %231 = vmatmul.mubr.f32.gmra.mrb[0].mxu0 %v57
    %v232 = vpop.f32.mrb[0].mxu0
    %v233 = vadd.f32 %v131, %v232
    %v234 = vpop.f32.mrb[0].mxu0
    %v235 = vadd.f32 %v135, %v234
    %236 = vmatprep.mubr.f32.mxu0 0.0
    %237 = vmatmul.mubr.f32.gmra.mrb[0].mxu0 %v58
    %v238 = vpop.f32.mrb[0].mxu0
    %v239 = vadd.f32 %v131, %v238
    %v240 = vpop.f32.mrb[0].mxu0
    %v241 = vadd.f32 %v135, %v240
    %242 = vmatprep.mubr.f32.mxu0 0.0
    %243 = vmatmul.mubr.f32.gmra.mrb[0].mxu0 %v59
    %v244 = vpop.f32.mrb[0].mxu0
    %v245 = vadd.f32 %v131, %v244
    %v246 = vpop.f32.mrb[0].mxu0
    %v247 = vadd.f32 %v135, %v246
    %248 = vmatprep.mubr.f32.mxu0 0.0
    %249 = vmatmul.mubr.f32.gmra.mrb[0].mxu0 %v60
    %v250 = vpop.f32.mrb[0].mxu0
    %v251 = vadd.f32 %v131, %v250
    %v252 = vpop.f32.mrb[0].mxu0
    %v253 = vadd.f32 %v135, %v252
    %254 = vmatprep.mubr.f32.mxu0 0.0
    %255 = vmatmul.mubr.f32.gmra.mrb[0].mxu0 %v61
    %v256 = vpop.f32.mrb[0].mxu0
    %v257 = vadd.f32 %v131, %v256
    %v258 = vpop.f32.mrb[0].mxu0
    %v259 = vadd.f32 %v135, %v258
    %260 = vdwg.mxu0
    %261 = vmatprep.subr.mxu0 %v65
    %262 = vmatpush1.msra.mxu0 %v64
    %263 = vmatprep.subr.mxu0 %v69
    %264 = vmatpush1.msra.mxu0 %v68
    %265 = vmatprep.subr.mxu0 %v73
    %266 = vmatpush1.msra.mxu0 %v72
    %267 = vmatprep.subr.mxu0 %v77
    %268 = vmatpush1.msra.mxu0 %v76
    %269 = vmatprep.subr.mxu0 %v81
    %270 = vmatpush1.msra.mxu0 %v80
    %271 = vmatprep.subr.mxu0 %v85
    %272 = vmatpush1.msra.mxu0 %v84
    %273 = vmatprep.subr.mxu0 %v89
    %274 = vmatpush1.msra.mxu0 %v88
    %275 = vmatprep.subr.mxu0 %v93
    %276 = vmatpush1.msra.mxu0 %v92
    %277 = vmatprep.subr.mxu0 %v97
    %278 = vmatpush1.msra.mxu0 %v96
    %279 = vmatprep.subr.mxu0 %v101
    %280 = vmatpush1.msra.mxu0 %v100
    %281 = vmatprep.subr.mxu0 %v105
    %282 = vmatpush1.msra.mxu0 %v104
    %283 = vmatprep.subr.mxu0 %v109
    %284 = vmatpush1.msra.mxu0 %v108
    %285 = vmatprep.subr.mxu0 %v113
    %286 = vmatpush1.msra.mxu0 %v112
    %287 = vmatprep.subr.mxu0 %v117
    %288 = vmatpush1.msra.mxu0 %v116
    %289 = vmatprep.subr.mxu0 %v121
    %290 = vmatpush1.msra.mxu0 %v120
    %291 = vmatprep.subr.mxu0 %v125
    %292 = vmatpush1.msra.mxu0 %v124
    %293 = vmatprep.subr.mxu0 0.0
    %294 = vmatpush1.msra.mxu0 0.0
    %295 = vmatprep.subr.mxu0 0.0
    %296 = vmatpush1.msra.mxu0 0.0
    %297 = vmatprep.subr.mxu0 0.0
    %298 = vmatpush1.msra.mxu0 0.0
    %299 = vmatprep.subr.mxu0 0.0
    %300 = vmatpush1.msra.mxu0 0.0
    %301 = vmatprep.subr.mxu0 0.0
    %302 = vmatpush1.msra.mxu0 0.0
    %303 = vmatprep.subr.mxu0 0.0
    %304 = vmatpush1.msra.mxu0 0.0
    %305 = vmatprep.subr.mxu0 0.0
    %306 = vmatpush1.msra.mxu0 0.0
    %307 = vmatprep.subr.mxu0 0.0
    %308 = vmatpush1.msra.mxu0 0.0
    %309 = vmatprep.subr.mxu0 0.0
    %310 = vmatpush1.msra.mxu0 0.0
    %311 = vmatprep.subr.mxu0 0.0
    %312 = vmatpush1.msra.mxu0 0.0
    %313 = vmatprep.subr.mxu0 0.0
    %314 = vmatpush1.msra.mxu0 0.0
    %315 = vmatprep.subr.mxu0 0.0
    %316 = vmatpush1.msra.mxu0 0.0
    %317 = vmatprep.subr.mxu0 0.0
    %318 = vmatpush1.msra.mxu0 0.0
    %319 = vmatprep.subr.mxu0 0.0
    %320 = vmatpush1.msra.mxu0 0.0
    %321 = vmatprep.subr.mxu0 0.0
    %322 = vmatpush1.msra.mxu0 0.0
    %323 = vmatprep.subr.mxu0 0.0
    %324 = vmatpush1.msra.mxu0 0.0
    %325 = vmatprep.mubr.f32.mxu0 0.0
    %326 = vmatmul.mubr.f32.gmra.mrb[0].mxu0 %v54
    %v327 = vpop.f32.mrb[0].mxu0
    %v328 = vadd.f32 %v139, %v327
    %v329 = vpop.f32.mrb[0].mxu0
    %v330 = vadd.f32 %v143, %v329
    %331 = vmatprep.mubr.f32.mxu0 0.0
    %332 = vmatmul.mubr.f32.gmra.mrb[0].mxu0 %v55
    %v333 = vpop.f32.mrb[0].mxu0
    %v334 = vadd.f32 %v139, %v333
    %v335 = vpop.f32.mrb[0].mxu0
    %v336 = vadd.f32 %v143, %v335
    %337 = vmatprep.mubr.f32.mxu0 0.0
    %338 = vmatmul.mubr.f32.gmra.mrb[0].mxu0 %v56
    %v339 = vpop.f32.mrb[0].mxu0
    %v340 = vadd.f32 %v139, %v339
    %v341 = vpop.f32.mrb[0].mxu0
    %v342 = vadd.f32 %v143, %v341
    %343 = vmatprep.mubr.f32.mxu0 0.0
    %344 = vmatmul.mubr.f32.gmra.mrb[0].mxu0 %v57
    %v345 = vpop.f32.mrb[0].mxu0
    %v346 = vadd.f32 %v139, %v345
    %v347 = vpop.f32.mrb[0].mxu0
    %v348 = vadd.f32 %v143, %v347
    %349 = vmatprep.mubr.f32.mxu0 0.0
    %350 = vmatmul.mubr.f32.gmra.mrb[0].mxu0 %v58
    %v351 = vpop.f32.mrb[0].mxu0
    %v352 = vadd.f32 %v139, %v351
    %v353 = vpop.f32.mrb[0].mxu0
    %v354 = vadd.f32 %v143, %v353
    %355 = vmatprep.mubr.f32.mxu0 0.0
    %356 = vmatmul.mubr.f32.gmra.mrb[0].mxu0 %v59
    %v357 = vpop.f32.mrb[0].mxu0
    %v358 = vadd.f32 %v139, %v357
    %v359 = vpop.f32.mrb[0].mxu0
    %v360 = vadd.f32 %v143, %v359
    %361 = vmatprep.mubr.f32.mxu0 0.0
    %362 = vmatmul.mubr.f32.gmra.mrb[0].mxu0 %v60
    %v363 = vpop.f32.mrb[0].mxu0
    %v364 = vadd.f32 %v139, %v363
    %v365 = vpop.f32.mrb[0].mxu0
    %v366 = vadd.f32 %v143, %v365
    %367 = vmatprep.mubr.f32.mxu0 0.0
    %368 = vmatmul.mubr.f32.gmra.mrb[0].mxu0 %v61
    %v369 = vpop.f32.mrb[0].mxu0
    %v370 = vadd.f32 %v139, %v369
    %v371 = vpop.f32.mrb[0].mxu0
    %v372 = vadd.f32 %v143, %v371
    %373 = vdwg.mxu0
    %374 = vst [vmem:[#allocation8] sm:$0xff] %v215
    %375 = vst [vmem:[#allocation8 + $0x8] sm:$0xff] %v217
    %376 = vst [vmem:[#allocation8 + $0x10] sm:$0xff] %v328
    %377 = vst [vmem:[#allocation8 + $0x18] sm:$0xff] %v330
    %378 = vst [vmem:[#allocation8 + $0x20] sm:$0xff] %v221
    %379 = vst [vmem:[#allocation8 + $0x28] sm:$0xff] %v223
    %380 = vst [vmem:[#allocation8 + $0x30] sm:$0xff] %v334
    %381 = vst [vmem:[#allocation8 + $0x38] sm:$0xff] %v336
    %382 = vst [vmem:[#allocation8 + $0x40] sm:$0xff] %v227
    %383 = vst [vmem:[#allocation8 + $0x48] sm:$0xff] %v229
    %384 = vst [vmem:[#allocation8 + $0x50] sm:$0xff] %v340
    %385 = vst [vmem:[#allocation8 + $0x58] sm:$0xff] %v342
    %386 = vst [vmem:[#allocation8 + $0x60] sm:$0xff] %v233
    %387 = vst [vmem:[#allocation8 + $0x68] sm:$0xff] %v235
    %388 = vst [vmem:[#allocation8 + $0x70] sm:$0xff] %v346
    %389 = vst [vmem:[#allocation8 + $0x78] sm:$0xff] %v348
    %390 = vst [vmem:[#allocation8 + $0x80] sm:$0xff] %v239
    %391 = vst [vmem:[#allocation8 + $0x88] sm:$0xff] %v241
    %392 = vst [vmem:[#allocation8 + $0x90] sm:$0xff] %v352
    %393 = vst [vmem:[#allocation8 + $0x98] sm:$0xff] %v354
    %394 = vst [vmem:[#allocation8 + $0xa0] sm:$0xff] %v245
    %395 = vst [vmem:[#allocation8 + $0xa8] sm:$0xff] %v247
    %396 = vst [vmem:[#allocation8 + $0xb0] sm:$0xff] %v358
    %397 = vst [vmem:[#allocation8 + $0xb8] sm:$0xff] %v360
    %398 = vst [vmem:[#allocation8 + $0xc0] sm:$0xff] %v251
    %399 = vst [vmem:[#allocation8 + $0xc8] sm:$0xff] %v253
    %400 = vst [vmem:[#allocation8 + $0xd0] sm:$0xff] %v364
    %401 = vst [vmem:[#allocation8 + $0xd8] sm:$0xff] %v366
    %402 = vst [vmem:[#allocation8 + $0xe0] sm:$0xff] %v257
    %403 = vst [vmem:[#allocation8 + $0xe8] sm:$0xff] %v259
    %404 = vst [vmem:[#allocation8 + $0xf0] sm:$0xff] %v370
    %405 = vst [vmem:[#allocation8 + $0xf8] sm:$0xff] %v372
    // Predicated region
    $region26: #{tpu_custom_call.1} parent=1 // pred_check
      _
    $region27: #{tpu_custom_call.1} parent=1 // pred_check_branch
      %407 = sbr.rel (0) target = $region29
    $region28: #{tpu_custom_call.1} parent=1 // pred_region
      %s409 = ssub.s32 4096, 4096
      %410 = vsyncadd [#allocation4], %s409
      %s411 = sshll.u32 [#allocation8], 4
      %s412 = int_to_ptr.vmem [resolvable:$true] %s411
      %417 = dma.vmem_to_hbm [thread:$0]  %s412, 4096, %s3, [#allocation4], 512, 512, 32
    $region29: #{tpu_custom_call.1} parent=1 // pred_fallthru
      _
    // Predicated region
    $region30: #{tpu_custom_call.1} parent=1 // pred_check
      _
    $region31: #{tpu_custom_call.1} parent=1 // pred_check_branch
      %419 = sbr.rel (0) target = $region33
    $region32: #{tpu_custom_call.1} parent=1 // pred_region
      %420 = dma.done [#allocation4], 4096
    $region33: #{tpu_custom_call.1} parent=1 // pred_fallthru
      _
    %421 = vsyncpa [#allocation3], 1
    %422 = vsyncpa [#allocation6], 1
    %423 = vsyncpa [#allocation4], 1

</llo_original>
